<compile_context>
chip_gen: v6e
topology: v6e:2x2x1
jax: 0.10.0
libtpu: 0.0.40
codegen_flags: <defaults>
</compile_context>

<pallas_src>
import functools

import jax
import jax.numpy as jnp
from jax.experimental import pallas as pl
from jax.experimental.pallas import tpu as pltpu


# ----------------------------------------------------------------------------
# helpers
# ----------------------------------------------------------------------------
def _round_up(n, m):
    return (n + m - 1) // m * m


def _pad2d(a, rows, cols):
    return jnp.pad(a, ((0, rows - a.shape[0]), (0, cols - a.shape[1])))


def _vmem_capacity_bytes():
    try:
        cap = getattr(pltpu.get_tpu_info(), "vmem_capacity_bytes", None)
        if cap:
            return int(cap)
    except Exception:
        pass
    return 64 * 1024 * 1024  # conservative default (v7x per-core VMEM)


def _ln_rows(s, g_ref, b_ref, h_true, eps):
    """Row LayerNorm of f32 (rows, Hp) over the first h_true lanes (padded lanes -> 0)."""
    hp = s.shape[-1]
    if hp != h_true:
        mask = jax.lax.broadcasted_iota(jnp.int32, s.shape, 1) < h_true
        s = jnp.where(mask, s, 0.0)
    mean = jnp.sum(s, axis=-1, keepdims=True) * (1.0 / h_true)
    c = s - mean
    if hp != h_true:
        c = jnp.where(mask, c, 0.0)
    var = jnp.sum(c * c, axis=-1, keepdims=True) * (1.0 / h_true)
    inv = jax.lax.rsqrt(var + eps)
    return c * inv * g_ref[...].astype(jnp.float32) + b_ref[...].astype(jnp.float32)


# ----------------------------------------------------------------------------
# Kernels
# ----------------------------------------------------------------------------
def qkv_proj_kernel(x_ref, w_ref, b_ref, o_ref):
    y = jnp.dot(x_ref[0], w_ref[...], preferred_element_type=jnp.float32)
    o_ref[0] = (y + b_ref[...].astype(jnp.float32)).astype(o_ref.dtype)


def mhsa_kernel(qkv_ref, o_ref, *, num_heads, head_dim, hidden, seq_true, scale):
    """Whole-sequence attention for one batch; heads sliced in-VMEM from (Sp, Qp)."""
    qkv = qkv_ref[0]                                    # (Sp, Qp), input dtype
    sp = qkv.shape[0]
    hp = o_ref.shape[-1]
    kmask = None
    if sp > seq_true:                                   # mask padded key positions
        kmask = jax.lax.broadcasted_iota(jnp.int32, (sp, sp), 1) < seq_true
    heads = []
    for h in range(num_heads):
        q = qkv[:, h * head_dim:(h + 1) * head_dim]
        k = qkv[:, hidden + h * head_dim: hidden + (h + 1) * head_dim]
        v = qkv[:, 2 * hidden + h * head_dim: 2 * hidden + (h + 1) * head_dim]
        # Scale q before QK (S*hd work); contract last dims of q and k (no K
        # transpose); MXU operands stay in the input dtype, f32 accumulation.
        s = jax.lax.dot_general(q * scale, k, (((1,), (1,)), ((), ())),
                                preferred_element_type=jnp.float32)
        if kmask is not None:
            s = jnp.where(kmask, s, -1e30)
        m = jnp.max(s, axis=-1, keepdims=True)
        p = jnp.exp(s - m)
        l = jnp.sum(p, axis=-1, keepdims=True)
        p = p * pl.reciprocal(l, approx=True)           # divide on the EUP slot
        heads.append(jnp.dot(p.astype(v.dtype), v, preferred_element_type=jnp.float32))
    ctx = jnp.concatenate(heads, axis=-1)               # (Sp, H) f32
    if hp > hidden:                                     # keep padded lanes zero
        ctx = jnp.concatenate([ctx, jnp.zeros((sp, hp - hidden), ctx.dtype)], axis=-1)
    o_ref[0] = ctx.astype(o_ref.dtype)


def outproj_ln_kernel(ctx_ref, w_ref, b_ref, res_ref, g_ref, bt_ref, o_ref, *,
                      h_true, eps):
    """x1 = LayerNorm(residual + ctx @ w_out + b_out): LN1 fused into the epilogue."""
    y = jnp.dot(ctx_ref[0], w_ref[...], preferred_element_type=jnp.float32)
    s = y + b_ref[...].astype(jnp.float32) + res_ref[0].astype(jnp.float32)
    o_ref[0] = _ln_rows(s, g_ref, bt_ref, h_true, eps).astype(o_ref.dtype)


def ffn_ln_kernel(x_ref, w1_ref, b1_ref, w2_ref, b2_ref, g_ref, bt_ref, o_ref,
                  acc_ref, *, h_true, eps):
    """out = LayerNorm(x1 + relu(x1@w1+b1)@w2 + b2): LN2 fused into last k-step."""
    k = pl.program_id(2)

    @pl.when(k == 0)
    def _():
        acc_ref[...] = jnp.zeros_like(acc_ref)

    h = jnp.dot(x_ref[0], w1_ref[...], preferred_element_type=jnp.float32)
    h = jnp.maximum(h + b1_ref[...].astype(jnp.float32), 0.0)
    # Intentional: intermediate downcast to the weight dtype so bf16 weights use
    # the bf16 MXU path; accumulation stays f32 in acc_ref.
    acc_ref[...] += jnp.dot(h.astype(w2_ref.dtype), w2_ref[...],
                            preferred_element_type=jnp.float32)

    @pl.when(k == pl.num_programs(2) - 1)
    def _():
        s = (acc_ref[...] + b2_ref[...].astype(jnp.float32)
             + x_ref[0].astype(jnp.float32))
        o_ref[0] = _ln_rows(s, g_ref, bt_ref, h_true, eps).astype(o_ref.dtype)


# ----------------------------------------------------------------------------
# Parameter preparation (padding hoisted out of the forward; call once)
# ----------------------------------------------------------------------------
def prepare_params(params):
    w_in, w1 = params["w_in"], params["w1"]
    H = w_in.shape[0]
    I = w1.shape[1]
    Hp = _round_up(H, 128)
    tq = min(512, _round_up(3 * H, 128))
    Qp = _round_up(3 * H, tq)

    vmem = _vmem_capacity_bytes()
    big_vmem = vmem >= 100 * 1024 * 1024      # v5e / v6e (128 MiB) vs v7x (64 MiB)
    tk = min(1024 if big_vmem else 512, _round_up(I, 128))
    Ip = _round_up(I, tk)
    vlim = int(vmem * 3 // 4)

    return dict(
        num_heads=params["num_heads"], H=H, I=I, Hp=Hp, Qp=Qp, Ip=Ip,
        tq=tq, tk=tk, vmem_limit=vlim,
        w_in=_pad2d(w_in, Hp, Qp),
        b_in=_pad2d(params["b_in"].reshape(1, -1), 1, Qp),
        w_out=_pad2d(params["w_out"], Hp, Hp),
        b_out=_pad2d(params["b_out"].reshape(1, -1), 1, Hp),
        ln1_g=_pad2d(params["ln1_g"].reshape(1, -1), 1, Hp),
        ln1_b=_pad2d(params["ln1_b"].reshape(1, -1), 1, Hp),
        w1=_pad2d(w1, Hp, Ip),
        b1=_pad2d(params["b1"].reshape(1, -1), 1, Ip),
        w2=_pad2d(params["w2"], Ip, Hp),
        b2=_pad2d(params["b2"].reshape(1, -1), 1, Hp),
        ln2_g=_pad2d(params["ln2_g"].reshape(1, -1), 1, Hp),
        ln2_b=_pad2d(params["ln2_b"].reshape(1, -1), 1, Hp),
    )


# ----------------------------------------------------------------------------
# Full TransformerBlock forward
# ----------------------------------------------------------------------------
def transformer_block(x, pp, eps=1e-5, mask=None):
    """x: (B, S, H). Computes ln1(x + MHSA(x)); ln2(x1 + FFN(x1)).
    TODO(synk): key_padding_mask (mask arg) not implemented; mask must be None."""
    assert mask is None
    B, S, H = x.shape
    nh = pp["num_heads"]
    assert H % nh == 0
    hd = H // nh
    Hp, Qp, Ip, tq, tk = pp["Hp"], pp["Qp"], pp["Ip"], pp["tq"], pp["tk"]
    vlim = pp["vmem_limit"]

    ts = min(256, _round_up(S, 8))
    Sp = _round_up(S, ts)
    xp = jnp.pad(x, ((0, 0), (0, Sp - S), (0, Hp - H)))

    # --- QKV in-projection: (B, Sp, Hp) @ (Hp, Qp) -> (B, Sp, Qp) (head-sliceable)
    qkv = pl.pallas_call(
        qkv_proj_kernel,
        out_shape=jax.ShapeDtypeStruct((B, Sp, Qp), x.dtype),
        grid_spec=pltpu.PrefetchScalarGridSpec(
            num_scalar_prefetch=0,
            grid=(B, Sp // ts, Qp // tq),
            in_specs=[
                pl.BlockSpec((1, ts, Hp), lambda b, i, j: (b, i, 0)),
                pl.BlockSpec((Hp, tq), lambda b, i, j: (0, j)),
                pl.BlockSpec((1, tq), lambda b, i, j: (0, j)),
            ],
            out_specs=pl.BlockSpec((1, ts, tq), lambda b, i, j: (b, i, j)),
        ),
        compiler_params=pltpu.CompilerParams(
            dimension_semantics=("parallel", "parallel", "parallel"),
            vmem_limit_bytes=vlim,
        ),
    )(xp, pp["w_in"], pp["b_in"])

    # --- MHSA core (per-batch whole-sequence softmax).
    # TODO(synk): switch to a kv-tiled flash-attention kernel for long S
    # (whole-sequence scores exceed comfortable VMEM headroom around S~1K on v7x).
    ctx = pl.pallas_call(
        functools.partial(mhsa_kernel, num_heads=nh, head_dim=hd, hidden=H,
                          seq_true=S, scale=1.0 / (hd ** 0.5)),
        out_shape=jax.ShapeDtypeStruct((B, Sp, Hp), x.dtype),
        grid_spec=pltpu.PrefetchScalarGridSpec(
            num_scalar_prefetch=0,
            grid=(B,),
            in_specs=[pl.BlockSpec((1, Sp, Qp), lambda b: (b, 0, 0))],
            out_specs=pl.BlockSpec((1, Sp, Hp), lambda b: (b, 0, 0)),
        ),
        compiler_params=pltpu.CompilerParams(
            dimension_semantics=("parallel",), vmem_limit_bytes=vlim),
    )(qkv)

    # --- Out-projection fused with residual add + LayerNorm1
    x1 = pl.pallas_call(
        functools.partial(outproj_ln_kernel, h_true=H, eps=eps),
        out_shape=jax.ShapeDtypeStruct((B, Sp, Hp), x.dtype),
        grid_spec=pltpu.PrefetchScalarGridSpec(
            num_scalar_prefetch=0,
            grid=(B, Sp // ts),
            in_specs=[
                pl.BlockSpec((1, ts, Hp), lambda b, i: (b, i, 0)),   # ctx tile
                pl.BlockSpec((Hp, Hp), lambda b, i: (0, 0)),         # w_out
                pl.BlockSpec((1, Hp), lambda b, i: (0, 0)),          # b_out
                pl.BlockSpec((1, ts, Hp), lambda b, i: (b, i, 0)),   # residual x
                pl.BlockSpec((1, Hp), lambda b, i: (0, 0)),          # ln1 gamma
                pl.BlockSpec((1, Hp), lambda b, i: (0, 0)),          # ln1 beta
            ],
            out_specs=pl.BlockSpec((1, ts, Hp), lambda b, i: (b, i, 0)),
        ),
        compiler_params=pltpu.CompilerParams(
            dimension_semantics=("parallel", "parallel"), vmem_limit_bytes=vlim),
    )(ctx, pp["w_out"], pp["b_out"], xp, pp["ln1_g"], pp["ln1_b"])

    # --- FFN fused with residual add + LayerNorm2 (reduction axis last)
    itemsize = x.dtype.itemsize
    cost = pl.CostEstimate(
        flops=4 * B * Sp * Hp * Ip,
        transcendentals=0,
        bytes_accessed=itemsize * (2 * B * Sp * Hp + 2 * Hp * Ip + Ip + 5 * Hp),
    )
    out = pl.pallas_call(
        functools.partial(ffn_ln_kernel, h_true=H, eps=eps),
        out_shape=jax.ShapeDtypeStruct((B, Sp, Hp), x.dtype),
        grid_spec=pltpu.PrefetchScalarGridSpec(
            num_scalar_prefetch=0,
            grid=(B, Sp // ts, Ip // tk),
            in_specs=[
                pl.BlockSpec((1, ts, Hp), lambda b, i, k: (b, i, 0)),  # x1 (resident over k)
                pl.BlockSpec((Hp, tk), lambda b, i, k: (0, k)),        # w1 k-tile
                pl.BlockSpec((1, tk), lambda b, i, k: (0, k)),         # b1 k-tile
                pl.BlockSpec((tk, Hp), lambda b, i, k: (k, 0)),        # w2 k-tile
                pl.BlockSpec((1, Hp), lambda b, i, k: (0, 0)),         # b2
                pl.BlockSpec((1, Hp), lambda b, i, k: (0, 0)),         # ln2 gamma
                pl.BlockSpec((1, Hp), lambda b, i, k: (0, 0)),         # ln2 beta
            ],
            out_specs=pl.BlockSpec((1, ts, Hp), lambda b, i, k: (b, i, 0)),
            scratch_shapes=[pltpu.VMEM((ts, Hp), jnp.float32)],
        ),
        compiler_params=pltpu.CompilerParams(
            dimension_semantics=("parallel", "parallel", "arbitrary"),
            vmem_limit_bytes=vlim,
        ),
        cost_estimate=cost,
    )(x1, pp["w1"], pp["b1"], pp["w2"], pp["b2"], pp["ln2_g"], pp["ln2_b"])

    return out[:, :S, :H]


# ----------------------------------------------------------------------------
# Pure-JAX reference (same math as the PyTorch module)
# ----------------------------------------------------------------------------
def transformer_block_ref(x, params, eps=1e-5):
    B, S, H = x.shape
    nh = params["num_heads"]
    hd = H // nh

    def ln(z, g, b):
        mu = jnp.mean(z, axis=-1, keepdims=True)
        var = jnp.mean((z - mu) ** 2, axis=-1, keepdims=True)
        return (z - mu) / jnp.sqrt(var + eps) * g + b

    qkv = x @ params["w_in"] + params["b_in"]
    q, k, v = jnp.split(qkv, 3, axis=-1)

    def heads(t):
        return t.reshape(B, S, nh, hd).transpose(0, 2, 1, 3)

    q, k, v = heads(q), heads(k), heads(v)
    s = jnp.einsum("bhqd,bhkd->bhqk", q, k) / (hd ** 0.5)
    p = jax.nn.softmax(s, axis=-1)
    ctx = jnp.einsum("bhqk,bhkd->bhqd", p, v)
    ctx = ctx.transpose(0, 2, 1, 3).reshape(B, S, H)
    attn_out = ctx @ params["w_out"] + params["b_out"]
    x1 = ln(x + attn_out, params["ln1_g"], params["ln1_b"])
    ffn = jnp.maximum(x1 @ params["w1"] + params["b1"], 0.0) @ params["w2"] + params["b2"]
    return ln(x1 + ffn, params["ln2_g"], params["ln2_b"])


def init_params(key, hidden, num_heads, inter, dtype=jnp.float32):
    ks = jax.random.split(key, 8)
    bh = 1.0 / hidden ** 0.5
    bi = 1.0 / inter ** 0.5

    def u(k, shape, b):
        return jax.random.uniform(k, shape, minval=-b, maxval=b, dtype=dtype)

    return dict(
        num_heads=num_heads,
        # weights stored pre-transposed as (in_features, out_features)
        w_in=u(ks[0], (hidden, 3 * hidden), bh),
        b_in=u(ks[1], (3 * hidden,), bh),
        w_out=u(ks[2], (hidden, hidden), bh),
        b_out=u(ks[3], (hidden,), bh),
        ln1_g=jnp.ones((hidden,), dtype), ln1_b=jnp.zeros((hidden,), dtype),
        w1=u(ks[4], (hidden, inter), bh),
        b1=u(ks[5], (inter,), bh),
        w2=u(ks[6], (inter, hidden), bi),
        b2=u(ks[7], (hidden,), bi),
        ln2_g=jnp.ones((hidden,), dtype), ln2_b=jnp.zeros((hidden,), dtype),
    )


if __name__ == "__main__":
    B, S, H, NH, I = 2, 8, 32, 4, 64
    key = jax.random.PRNGKey(0)
    kx, kp = jax.random.split(key)
    x = jax.random.normal(kx, (B, S, H), dtype=jnp.float32)
    params = init_params(kp, H, NH, I)

    # Pad weights once (not per forward call).
    pp = prepare_params(params)
    out = transformer_block(x, pp)
    out = jax.block_until_ready(out)
    ref = transformer_block_ref(x, params)
    assert out.shape == (B, S, H)
    err = float(jnp.max(jnp.abs(out - ref)))
    assert err < 2e-2, err

    # bf16 path: MXU operands stay bf16 inside the kernels (f32 accumulation).
    params_bf16 = {k_: (v.astype(jnp.bfloat16) if isinstance(v, jax.Array) else v)
                   for k_, v in params.items()}
    pp_bf16 = prepare_params(params_bf16)
    out_bf16 = jax.block_until_ready(
        transformer_block(x.astype(jnp.bfloat16), pp_bf16))
    assert jnp.allclose(out_bf16.astype(jnp.float32), ref, atol=2e-1, rtol=2e-1)

    print("KERNEL_OK")
</pallas_src>

<mosaic_0001>
module attributes {stable_mosaic.version = 11 : i64} {
  func.func @qkv_proj_kernel(%arg0: i32, %arg1: i32, %arg2: i32, %arg3: memref<1x8x128xf32, #tpu.memory_space<vmem>>, %arg4: memref<128x128xf32, #tpu.memory_space<vmem>>, %arg5: memref<1x128xf32, #tpu.memory_space<vmem>>, %arg6: memref<1x8x128xf32, #tpu.memory_space<vmem>>) attributes {dimension_semantics = [#tpu.dimension_semantics<parallel>, #tpu.dimension_semantics<parallel>, #tpu.dimension_semantics<parallel>], iteration_bounds = array<i64: 2, 1, 1>, scalar_prefetch = 0 : i64, scratch_operands = 0 : i64, tpu.core_type = #tpu.core_type<tc>, window_params = [{transform_indices = @transform_0, window_bounds = array<i64: 1, 8, 128>}, {transform_indices = @transform_1, window_bounds = array<i64: 128, 128>}, {transform_indices = @transform_2, window_bounds = array<i64: 1, 128>}, {transform_indices = @transform_3, window_bounds = array<i64: 1, 8, 128>}]} {
    %c0 = arith.constant 0 : index
    %c0_0 = arith.constant 0 : index
    %c0_1 = arith.constant 0 : index
    %0 = vector.load %arg3[%c0, %c0_0, %c0_1] : memref<1x8x128xf32, #tpu.memory_space<vmem>>, vector<1x8x128xf32>
    %1 = vector.shape_cast %0 : vector<1x8x128xf32> to vector<8x128xf32>
    %c0_2 = arith.constant 0 : index
    %c0_3 = arith.constant 0 : index
    %2 = vector.load %arg4[%c0_2, %c0_3] : memref<128x128xf32, #tpu.memory_space<vmem>>, vector<128x128xf32>
    %cst = arith.constant dense<0.000000e+00> : vector<8x128xf32>
    %3 = tpu.matmul %1, %2, %cst {dimension_numbers = #tpu.dot_dimension_numbers<[1], [0], [0], [1], [0, 0, 1, 1], [], []>} : vector<8x128xf32>, vector<128x128xf32>, vector<8x128xf32> -> vector<8x128xf32>
    %c0_4 = arith.constant 0 : index
    %c0_5 = arith.constant 0 : index
    %4 = vector.load %arg5[%c0_4, %c0_5] : memref<1x128xf32, #tpu.memory_space<vmem>>, vector<1x128xf32>
    %5 = vector.broadcast %4 : vector<1x128xf32> to vector<8x128xf32>
    %6 = arith.addf %3, %5 : vector<8x128xf32>
    %c0_6 = arith.constant 0 : index
    %c0_7 = arith.constant 0 : index
    %c0_8 = arith.constant 0 : index
    %7 = vector.load %arg6[%c0_6, %c0_7, %c0_8] : memref<1x8x128xf32, #tpu.memory_space<vmem>>, vector<1x8x128xf32>
    %8 = vector.shape_cast %7 : vector<1x8x128xf32> to vector<8x128xf32>
    %9 = vector.shape_cast %6 : vector<8x128xf32> to vector<1x8x128xf32>
    tpu.vector_store %arg6[%c0_6, %c0_7, %c0_8], %9 {strides = array<i32>} : memref<1x8x128xf32, #tpu.memory_space<vmem>>, vector<1x8x128xf32>,
    return
  }
  func.func @transform_0(%arg0: i32, %arg1: i32, %arg2: i32) -> (i32, i32, i32) {
    %c0_i32 = arith.constant 0 : i32
    %c0_i32_0 = arith.constant 0 : i32
    return %arg0, %arg1, %c0_i32 : i32, i32, i32
  }
  func.func @transform_1(%arg0: i32, %arg1: i32, %arg2: i32) -> (i32, i32) {
    %c0_i32 = arith.constant 0 : i32
    %c0_i32_0 = arith.constant 0 : i32
    return %c0_i32, %arg2 : i32, i32
  }
  func.func @transform_2(%arg0: i32, %arg1: i32, %arg2: i32) -> (i32, i32) {
    %c0_i32 = arith.constant 0 : i32
    %c0_i32_0 = arith.constant 0 : i32
    return %c0_i32, %arg2 : i32, i32
  }
  func.func @transform_3(%arg0: i32, %arg1: i32, %arg2: i32) -> (i32, i32, i32) {
    %c0_i32 = arith.constant 0 : i32
    return %arg0, %arg1, %arg2 : i32, i32, i32
  }
}

</mosaic_0001>

<llo_original>
// kernel: tpu_custom_call.1
$region0: #{tpu_custom_call.1}
  #allocation0 [shape = 'u32[]', space=smem, size = 0x4, offset = 0x4, fixed_abs, tag = 'smem constant byte address 0x4 - core index']
  #allocation1 [shape = 'u32[144,128]{1,0:T(1,128)}', space=vmem, size = 0x12000, scoped, tag = 'internal scratch']
  %s0 = inlined_call_operand.hbm [shape: f32[2,8,128], index: 0, kind: input, shape index: {}]
  %s1 = inlined_call_operand.hbm [shape: f32[128,128], index: 1, kind: input, shape index: {}]
  %s2 = inlined_call_operand.vmem [shape: f32[1,128], index: 2, kind: input, shape index: {}]
  %s3 = inlined_call_operand.hbm [shape: f32[2,8,128], index: 3, kind: output, shape index: {}]
  %s4 = sld [smem:[#allocation0]]
  $region53: #{tpu_custom_call.1} parent=0
    _
  %s6 = ssub.s32 1, %s4
  %s7 = scalar_select 0, %s6, %s4
  $region1: #{tpu_custom_call.1} parent=0
    #allocation2 [shape = 'u8[8192]{0}', space=vmem, size = 0x2000, scoped, tag = 'input window, operand 0']
    #allocation3 [shape = 's32[2]{0}', space=sflag, size = 0x8, scoped, tag = 'scoped memory for tpu_custom_call.1']
    #allocation4 [shape = 's32[2]{0}', space=sflag, size = 0x8, scoped, tag = 'scoped memory for tpu_custom_call.1']
    #allocation5 [shape = 'u8[65536]{0}', space=vmem, size = 0x10000, scoped, tag = 'input window, operand 1, single buffered']
    #allocation6 [shape = 's32[1]{0}', space=sflag, size = 0x4, scoped, tag = 'scoped memory for tpu_custom_call.1']
    #allocation7 [shape = 'u8[8192]{0}', space=vmem, size = 0x2000, scoped, tag = 'output window, operand 0']
    %8 = vsyncpa [#allocation3], 0
    %s9 = scalar_lea.sflag [#allocation3], 1
    %10 = vsyncpa %s9, 0
    %11 = vsyncpa [#allocation6], 0
    %12 = vsyncpa [#allocation4], 0
    %s13 = scalar_lea.sflag [#allocation4], 1
    %14 = vsyncpa %s13, 0
    loop: start=0, step=1, limit=4
    $region2: #{tpu_custom_call.1} parent=1 // loop_pre_header
      _
    $region3: #{tpu_custom_call.1} parent=1 // loop_header
      %s16 = sphi 0, %s20
      %p17 = scmp.ge.s32.totalorder %s16, 4
      %s23 = sphi 0, %s42
      %s24 = sphi 0, %s38
      %s25 = sphi 0, %s34
      %s26 = sphi 0, %s23
      %s27 = sphi 0, %s24
      %s28 = sphi 0, %s25
      %s29 = sphi 0, %s26
      %s30 = sphi 0, %s27
      %s31 = sphi 0, %s28
      %s47 = sphi 0, %s49
      %s50 = sphi 0, %s47
      %s51 = sphi 0, %s50
      %s67 = sphi 0, %s51
      %s73 = sphi 0, %s75
      %s76 = sphi 0, %s73
      %s77 = sphi 0, %s76
      %s93 = sphi 0, %s77
      %s99 = sphi 0, %s101
      %s102 = sphi 0, %s99
      %s103 = sphi 0, %s102
      %s119 = sphi 0, %s103
      %s129 = sphi 0, %s131
      %s132 = sphi 0, %s129
      %s133 = sphi 0, %s132
      %s149 = sphi 0, %s133
    $region4: #{tpu_custom_call.1} parent=1 // loop_header_branch
      %19 = sbr.rel (%p17) target = $region8
    $region5: #{tpu_custom_call.1} parent=1 // loop_body
      %s21 = ssub.s32 %s16, 1
      %s22 = ssub.s32 %s16, 2
      %s32 = sadd.s32 1, %s25
      %p33 = scmp.ge.s32.totalorder %s32, 1
      %s34 = scalar_select %p33, 0, %s32
      %s35 = sadd.s32 1, %s24
      %s36 = scalar_select %p33, %s35, %s24
      %p37 = scmp.ge.s32.totalorder %s36, 1
      %s38 = scalar_select %p37, 0, %s36
      %s39 = sadd.s32 1, %s23
      %s40 = scalar_select %p37, %s39, %s23
      %p41 = scmp.ge.s32.totalorder %s40, 2
      %s42 = scalar_select %p41, 0, %s40
      %s43 = ssub.s32 %s23, %s42
      %s44 = ssub.s32 %s24, %s38
      %s45 = sor.u32 %s43, %s44
      %p46 = scmp.eq.s32.totalorder %s45, 0
      %s48 = sadd.s32 %s47, 1
      %s49 = scalar_select %p46, %s47, %s48
      %p52 = pneg %p46
      %p53 = scmp.eq.s32.totalorder %s16, 1
      %p54 = por %p52, %p53
      %p55 = scmp.ne.s32.totalorder %s47, %s50
      %p56 = scmp.eq.s32.totalorder %s16, 0
      %p57 = por %p55, %p56
      %p58 = scmp.ne.s32.totalorder %s47, %s50
      %p59 = scmp.eq.s32.totalorder %s21, 1
      %p60 = por %p58, %p59
      %p61 = scmp.ne.s32.totalorder %s50, %s51
      %p62 = scmp.eq.s32.totalorder %s21, 0
      %p63 = por %p61, %p62
      %p64 = scmp.ne.s32.totalorder %s50, %s51
      %p65 = scmp.eq.s32.totalorder %s22, 1
      %p66 = por %p64, %p65
      %p68 = scmp.ne.s32.totalorder %s51, %s67
      %p69 = scmp.eq.s32.totalorder %s22, 0
      %p70 = por %p68, %p69
      %s71 = ssub.s32 %s25, %s34
      %p72 = scmp.eq.s32.totalorder %s71, 0
      %s74 = sadd.s32 %s73, 1
      %s75 = scalar_select %p72, %s73, %s74
      %p78 = pneg %p72
      %p79 = scmp.eq.s32.totalorder %s16, 1
      %p80 = por %p78, %p79
      %p81 = scmp.ne.s32.totalorder %s73, %s76
      %p82 = scmp.eq.s32.totalorder %s16, 0
      %p83 = por %p81, %p82
      %p84 = scmp.ne.s32.totalorder %s73, %s76
      %p85 = scmp.eq.s32.totalorder %s21, 1
      %p86 = por %p84, %p85
      %p87 = scmp.ne.s32.totalorder %s76, %s77
      %p88 = scmp.eq.s32.totalorder %s21, 0
      %p89 = por %p87, %p88
      %p90 = scmp.ne.s32.totalorder %s76, %s77
      %p91 = scmp.eq.s32.totalorder %s22, 1
      %p92 = por %p90, %p91
      %p94 = scmp.ne.s32.totalorder %s77, %s93
      %p95 = scmp.eq.s32.totalorder %s22, 0
      %p96 = por %p94, %p95
      %s97 = ssub.s32 %s25, %s34
      %p98 = scmp.eq.s32.totalorder %s97, 0
      %s100 = sadd.s32 %s99, 1
      %s101 = scalar_select %p98, %s99, %s100
      %p104 = pneg %p98
      %p105 = scmp.eq.s32.totalorder %s16, 1
      %p106 = por %p104, %p105
      %p107 = scmp.ne.s32.totalorder %s99, %s102
      %p108 = scmp.eq.s32.totalorder %s16, 0
      %p109 = por %p107, %p108
      %p110 = scmp.ne.s32.totalorder %s99, %s102
      %p111 = scmp.eq.s32.totalorder %s21, 1
      %p112 = por %p110, %p111
      %p113 = scmp.ne.s32.totalorder %s102, %s103
      %p114 = scmp.eq.s32.totalorder %s21, 0
      %p115 = por %p113, %p114
      %p116 = scmp.ne.s32.totalorder %s102, %s103
      %p117 = scmp.eq.s32.totalorder %s22, 1
      %p118 = por %p116, %p117
      %p120 = scmp.ne.s32.totalorder %s103, %s119
      %p121 = scmp.eq.s32.totalorder %s22, 0
      %p122 = por %p120, %p121
      %s123 = ssub.s32 %s23, %s42
      %s124 = ssub.s32 %s24, %s38
      %s125 = sor.u32 %s123, %s124
      %s126 = ssub.s32 %s25, %s34
      %s127 = sor.u32 %s125, %s126
      %p128 = scmp.eq.s32.totalorder %s127, 0
      %s130 = sadd.s32 %s129, 1
      %s131 = scalar_select %p128, %s129, %s130
      %p134 = pneg %p128
      %p135 = scmp.eq.s32.totalorder %s16, 1
      %p136 = por %p134, %p135
      %p137 = scmp.ne.s32.totalorder %s129, %s132
      %p138 = scmp.eq.s32.totalorder %s16, 0
      %p139 = por %p137, %p138
      %p140 = scmp.ne.s32.totalorder %s129, %s132
      %p141 = scmp.eq.s32.totalorder %s21, 1
      %p142 = por %p140, %p141
      %p143 = scmp.ne.s32.totalorder %s132, %s133
      %p144 = scmp.eq.s32.totalorder %s21, 0
      %p145 = por %p143, %p144
      %p146 = scmp.ne.s32.totalorder %s132, %s133
      %p147 = scmp.eq.s32.totalorder %s22, 1
      %p148 = por %p146, %p147
      %p150 = scmp.ne.s32.totalorder %s133, %s149
      %p151 = scmp.eq.s32.totalorder %s22, 0
      %p152 = por %p150, %p151
      %p153 = scmp.le.s32.totalorder 1, %s16
      %p154 = scmp.lt.s32.totalorder %s16, 3
      %p155 = pnand %p153, %p154
      %p156 = pneg %p155
      // Predicated region
      $region9: #{tpu_custom_call.1} parent=5 // pred_check
        _
      $region10: #{tpu_custom_call.1} parent=5 // pred_check_branch
        %158 = sbr.rel (%p155) target = $region12
      $region11: #{tpu_custom_call.1} parent=5 // pred_region
        %s159 = ssub.s32 %s16, 1
        // Predicated region
        $region13: #{tpu_custom_call.1} parent=11 // pred_check
          %p160 = pneg %p89
        $region14: #{tpu_custom_call.1} parent=11 // pred_check_branch
          %162 = sbr.rel (%p160) target = $region16
        $region15: #{tpu_custom_call.1} parent=11 // pred_region
          %s164 = ssub.s32 2048, 2048
          %165 = vsyncadd [#allocation6], %s164
          %s166 = smul.addr %s28, 128
          %s167 = scalar_lea.hbm %s1, %s166
          %s168 = sshll.u32 [#allocation5], 4
          %s169 = int_to_ptr.vmem [resolvable:$true] %s168
          %174 = dma.hbm_to_vmem [thread:$0]  %s167, 2048, %s169, [#allocation6], 128, 128, 8
        $region16: #{tpu_custom_call.1} parent=11 // pred_fallthru
          _
        // Predicated region
        $region17: #{tpu_custom_call.1} parent=11 // pred_check
          %p175 = pneg %p115
        $region18: #{tpu_custom_call.1} parent=11 // pred_check_branch
          %177 = sbr.rel (%p175) target = $region20
        $region19: #{tpu_custom_call.1} parent=11 // pred_region
          %p178 = scmp.lt.s32.totalorder %s28, 0
          %s179 = scalar_select %p178, %s28, 0
          %s180 = scalar_lea.vmem %s2, %s179
        $region20: #{tpu_custom_call.1} parent=11 // pred_fallthru
          _
      $region12: #{tpu_custom_call.1} parent=5 // pred_fallthru
        _
      %p181 = scmp.lt.s32.totalorder %s16, 2
      // Predicated region
      $region21: #{tpu_custom_call.1} parent=5 // pred_check
        %p182 = pneg %p181
      $region22: #{tpu_custom_call.1} parent=5 // pred_check_branch
        %184 = sbr.rel (%p182) target = $region24
      $region23: #{tpu_custom_call.1} parent=5 // pred_region
        // Predicated region
        $region25: #{tpu_custom_call.1} parent=23 // pred_check
          %p185 = pneg %p57
        $region26: #{tpu_custom_call.1} parent=23 // pred_check_branch
          %187 = sbr.rel (%p185) target = $region28
        $region27: #{tpu_custom_call.1} parent=23 // pred_region
          %s188 = sand.u32 %s47, 1
          %s189 = scalar_lea.sflag [#allocation3], %s188
          %s190 = sand.u32 %s47, 1
          %s191 = smul.addr %s190, 8
          %s192 = scalar_lea.vmem [#allocation2], %s191
          %s194 = ssub.s32 128, 128
          %195 = vsyncadd %s189, %s194
          %s196 = sadd.s32 %s24, %s23
          %s197 = smul.addr %s196, 128
          %s198 = scalar_lea.hbm %s0, %s197
          %s200 = sshll.u32 %s192, 4
          %s201 = int_to_ptr.vmem [resolvable:$true] %s200
          %203 = dma.hbm_to_vmem [thread:$0]  %s198, 128, %s201, %s189
        $region28: #{tpu_custom_call.1} parent=23 // pred_fallthru
          _
      $region24: #{tpu_custom_call.1} parent=5 // pred_fallthru
        _
      %p204 = scmp.le.s32.totalorder 1, %s16
      %p205 = scmp.lt.s32.totalorder %s16, 3
      %p206 = pnand %p204, %p205
      %p207 = pneg %p206
      // Predicated region
      $region29: #{tpu_custom_call.1} parent=5 // pred_check
        _
      $region30: #{tpu_custom_call.1} parent=5 // pred_check_branch
        %209 = sbr.rel (%p206) target = $region32
      $region31: #{tpu_custom_call.1} parent=5 // pred_region
        %s210 = ssub.s32 %s16, 1
        %s211 = sand.u32 %s50, 1
        %s212 = scalar_lea.sflag [#allocation3], %s211
        %s213 = sand.u32 %s50, 1
        %s214 = smul.addr %s213, 8
        %s215 = scalar_lea.vmem [#allocation2], %s214
        // Predicated region
        $region33: #{tpu_custom_call.1} parent=31 // pred_check
          %p216 = pneg %p63
        $region34: #{tpu_custom_call.1} parent=31 // pred_check_branch
          %218 = sbr.rel (%p216) target = $region36
        $region35: #{tpu_custom_call.1} parent=31 // pred_region
          %219 = dma.done %s212, 128
        $region36: #{tpu_custom_call.1} parent=31 // pred_fallthru
          _
        // Predicated region
        $region37: #{tpu_custom_call.1} parent=31 // pred_check
          %p220 = pneg %p89
        $region38: #{tpu_custom_call.1} parent=31 // pred_check_branch
          %222 = sbr.rel (%p220) target = $region40
        $region39: #{tpu_custom_call.1} parent=31 // pred_region
          %223 = dma.done [#allocation6], 2048
        $region40: #{tpu_custom_call.1} parent=31 // pred_fallthru
          _
        %s224 = sand.u32 %s50, 1
        %s225 = scalar_lea.sflag [#allocation3], %s224
        %s226 = sand.u32 %s50, 1
        %s227 = smul.addr %s226, 8
        %s228 = scalar_lea.vmem [#allocation2], %s227
        %p229 = pneg %p63
        %p230 = pneg %p60
        %p231 = pneg %p89
        %p232 = pneg %p86
        %p233 = scmp.lt.s32.totalorder %s28, 0
        %s234 = scalar_select %p233, %s28, 0
        %s235 = scalar_lea.vmem %s2, %s234
        %p236 = pneg %p115
        %p237 = pneg %p112
        %p238 = pneg %p145
        %p239 = pneg %p142
        %s240 = sand.u32 %s132, 1
        %s241 = scalar_lea.sflag [#allocation4], %s240
        %s242 = sand.u32 %s132, 1
        %s243 = smul.addr %s242, 8
        %s244 = scalar_lea.vmem [#allocation7], %s243
        %p245 = scmp.lt.s32.totalorder %s28, 0
        %s246 = scalar_select %p245, %s28, 0
        %s247 = scalar_lea.vmem %s2, %s246
        %v248 = vld [vmem:[%s215] sm:$0xff]
        %v249 = vld [vmem:[#allocation5] sm:$0xff]
        %v250 = vld [vmem:[#allocation5 + $0x8] sm:$0xff]
        %v251 = vld [vmem:[#allocation5 + $0x10] sm:$0xff]
        %v252 = vld [vmem:[#allocation5 + $0x18] sm:$0xff]
        %v253 = vld [vmem:[#allocation5 + $0x20] sm:$0xff]
        %v254 = vld [vmem:[#allocation5 + $0x28] sm:$0xff]
        %v255 = vld [vmem:[#allocation5 + $0x30] sm:$0xff]
        %v256 = vld [vmem:[#allocation5 + $0x38] sm:$0xff]
        %v257 = vld [vmem:[#allocation5 + $0x40] sm:$0xff]
        %v258 = vld [vmem:[#allocation5 + $0x48] sm:$0xff]
        %v259 = vld [vmem:[#allocation5 + $0x50] sm:$0xff]
        %v260 = vld [vmem:[#allocation5 + $0x58] sm:$0xff]
        %v261 = vld [vmem:[#allocation5 + $0x60] sm:$0xff]
        %v262 = vld [vmem:[#allocation5 + $0x68] sm:$0xff]
        %v263 = vld [vmem:[#allocation5 + $0x70] sm:$0xff]
        %v264 = vld [vmem:[#allocation5 + $0x78] sm:$0xff]
        %v265 = vld [vmem:[%s247] sm:$0x1]
        %v267 = vlaneseq
        %v268 = vshrl.u32 %v267, 7
        %v269 = vsub.s32 0, %v268
        %v270 = vrot.slane %v265, %v269
        %272 = vmatprep.subr.mxu0 0.0
        %273 = vmatpush1.msra.mxu0 %v264
        %274 = vmatprep.subr.mxu0 0.0
        %275 = vmatpush1.msra.mxu0 %v263
        %276 = vmatprep.subr.mxu0 0.0
        %277 = vmatpush1.msra.mxu0 %v262
        %278 = vmatprep.subr.mxu0 0.0
        %279 = vmatpush1.msra.mxu0 %v261
        %280 = vmatprep.subr.mxu0 0.0
        %281 = vmatpush1.msra.mxu0 %v260
        %282 = vmatprep.subr.mxu0 0.0
        %283 = vmatpush1.msra.mxu0 %v259
        %284 = vmatprep.subr.mxu0 0.0
        %285 = vmatpush1.msra.mxu0 %v258
        %286 = vmatprep.subr.mxu0 0.0
        %287 = vmatpush1.msra.mxu0 %v257
        %288 = vmatprep.subr.mxu0 0.0
        %289 = vmatpush1.msra.mxu0 %v256
        %290 = vmatprep.subr.mxu0 0.0
        %291 = vmatpush1.msra.mxu0 %v255
        %292 = vmatprep.subr.mxu0 0.0
        %293 = vmatpush1.msra.mxu0 %v254
        %294 = vmatprep.subr.mxu0 0.0
        %295 = vmatpush1.msra.mxu0 %v253
        %296 = vmatprep.subr.mxu0 0.0
        %297 = vmatpush1.msra.mxu0 %v252
        %298 = vmatprep.subr.mxu0 0.0
        %299 = vmatpush1.msra.mxu0 %v251
        %300 = vmatprep.subr.mxu0 0.0
        %301 = vmatpush1.msra.mxu0 %v250
        %302 = vmatprep.subr.mxu0 0.0
        %303 = vmatpush1.msra.mxu0 %v249
        %304 = vmatprep.subr.mxu0 0.0
        %305 = vmatpush2.msra.mxu0 0.0
        %306 = vmatprep.subr.mxu0 0.0
        %307 = vmatpush2.msra.mxu0 0.0
        %308 = vmatprep.subr.mxu0 0.0
        %309 = vmatpush2.msra.mxu0 0.0
        %310 = vmatprep.subr.mxu0 0.0
        %311 = vmatpush2.msra.mxu0 0.0
        %312 = vmatprep.subr.mxu0 0.0
        %313 = vmatpush2.msra.mxu0 0.0
        %314 = vmatprep.subr.mxu0 0.0
        %315 = vmatpush2.msra.mxu0 0.0
        %316 = vmatprep.subr.mxu0 0.0
        %317 = vmatpush2.msra.mxu0 0.0
        %318 = vmatprep.subr.mxu0 0.0
        %319 = vmatpush2.msra.mxu0 0.0
        %320 = vmatprep.subr.mxu0 0.0
        %321 = vmatpush2.msra.mxu0 0.0
        %322 = vmatprep.subr.mxu0 0.0
        %323 = vmatpush2.msra.mxu0 0.0
        %324 = vmatprep.subr.mxu0 0.0
        %325 = vmatpush2.msra.mxu0 0.0
        %326 = vmatprep.subr.mxu0 0.0
        %327 = vmatpush2.msra.mxu0 0.0
        %328 = vmatprep.subr.mxu0 0.0
        %329 = vmatpush2.msra.mxu0 0.0
        %330 = vmatprep.subr.mxu0 0.0
        %331 = vmatpush2.msra.mxu0 0.0
        %332 = vmatprep.subr.mxu0 0.0
        %333 = vmatpush2.msra.mxu0 0.0
        %334 = vmatprep.subr.mxu0 0.0
        %335 = vmatpush2.msra.mxu0 0.0
        %336 = vmatprep.mubr.f32.mxu0 0.0
        %337 = vmatmul.mubr.f32.gmra.mxu0 %v248
        %v338 = vpop.f32.mrf.mxu0
        %v339 = vadd.f32 %v270, %v338
        %v340 = vpop.f32.mrf.mxu0
        %341 = vdwg.mxu0
        %342 = vst [vmem:[%s244] sm:$0xff] %v339
        %s343 = sand.u32 %s132, 1
        %s344 = scalar_lea.sflag [#allocation4], %s343
        %s345 = sand.u32 %s132, 1
        %s346 = smul.addr %s345, 8
        %s347 = scalar_lea.vmem [#allocation7], %s346
        // Predicated region
        $region41: #{tpu_custom_call.1} parent=31 // pred_check
          %p348 = pneg %p142
        $region42: #{tpu_custom_call.1} parent=31 // pred_check_branch
          %350 = sbr.rel (%p348) target = $region44
        $region43: #{tpu_custom_call.1} parent=31 // pred_region
          %s352 = ssub.s32 128, 128
          %353 = vsyncadd %s344, %s352
          %s354 = sadd.s32 %s28, %s27
          %s355 = sadd.s32 %s354, %s26
          %s356 = smul.addr %s355, 128
          %s357 = scalar_lea.hbm %s3, %s356
          %s359 = sshll.u32 %s347, 4
          %s360 = int_to_ptr.vmem [resolvable:$true] %s359
          %362 = dma.vmem_to_hbm [thread:$0]  %s360, 128, %s357, %s344
        $region44: #{tpu_custom_call.1} parent=31 // pred_fallthru
          _
      $region32: #{tpu_custom_call.1} parent=5 // pred_fallthru
        _
      %p363 = scmp.le.s32.totalorder 2, %s16
      // Predicated region
      $region45: #{tpu_custom_call.1} parent=5 // pred_check
        %p364 = pneg %p363
      $region46: #{tpu_custom_call.1} parent=5 // pred_check_branch
        %366 = sbr.rel (%p364) target = $region48
      $region47: #{tpu_custom_call.1} parent=5 // pred_region
        %s367 = ssub.s32 %s16, 2
        // Predicated region
        $region49: #{tpu_custom_call.1} parent=47 // pred_check
          %p368 = pneg %p148
        $region50: #{tpu_custom_call.1} parent=47 // pred_check_branch
          %370 = sbr.rel (%p368) target = $region52
        $region51: #{tpu_custom_call.1} parent=47 // pred_region
          %s371 = sand.u32 %s133, 1
          %s372 = scalar_lea.sflag [#allocation4], %s371
          %s373 = sand.u32 %s133, 1
          %s374 = smul.addr %s373, 8
          %s375 = scalar_lea.vmem [#allocation7], %s374
          %376 = dma.done %s372, 128
        $region52: #{tpu_custom_call.1} parent=47 // pred_fallthru
          _
      $region48: #{tpu_custom_call.1} parent=5 // pred_fallthru
        _
    $region6: #{tpu_custom_call.1} parent=1 // loop_footer
      %s20 = sadd.s32 1, %s16
    $region7: #{tpu_custom_call.1} parent=1 // loop_footer_branch
      %15 = sbr.rel target = $region3
    $region8: #{tpu_custom_call.1} parent=1 // loop_exit
      _
    %377 = vsyncpa [#allocation3], 1
    %s378 = scalar_lea.sflag [#allocation3], 1
    %379 = vsyncpa %s378, 1
    %380 = vsyncpa [#allocation6], 1
    %381 = vsyncpa [#allocation4], 1
    %s382 = scalar_lea.sflag [#allocation4], 1
    %383 = vsyncpa %s382, 1

</llo_original>
